<compile_context>
chip_gen: v5e
topology: v5e:2x2
jax: 0.10.0
libtpu: 0.0.40
codegen_flags: <defaults>
</compile_context>

<pallas_src>
import math
from functools import partial

import jax
import jax.numpy as jnp
from jax import lax
from jax.experimental import pallas as pl
from jax.experimental.pallas import tpu as pltpu

TWO_PI = 2.0 * math.pi
HALF_PI = 0.5 * math.pi
_LANES = 128


def _round_up(n, m):
    return ((n + m - 1) // m) * m


def _make_packed_kernel(g):
    """Kernel writing one lane-dense (R, 128) tile of the row-major sin|cos slab.

    Refs:
      x_ref : (R, g)   f32 -- g consecutive timesteps per 128-lane output row
      w_ref : (1, 128) f32 -- tiled [2*pi*w | 2*pi*w] pattern (G copies)
      p_ref : (1, 128) f32 -- tiled [0]*H + [pi/2]*H phase pattern (G copies)
      e_ref : (g, 128) f32 -- one-hot lane-expansion matrix E[j, l] = (l // 2H == j)
      o_ref : (R, 128)     -- out[r, j*2H + c] = sin(2*pi * x[r*g + j] * w[c % H] + phase[c])
    """

    def kernel(x_ref, w_ref, p_ref, e_ref, o_ref):
        if g == 1:
            x_lanes = x_ref[...]  # (R, 1); broadcasts across lanes below
        else:
            # Exact lane replication (x * {0,1}) via a tiny matmul on the idle MXU.
            x_lanes = jnp.dot(
                x_ref[...],
                e_ref[...],
                preferred_element_type=jnp.float32,
                precision=lax.Precision.HIGHEST,
            )
        theta = x_lanes * w_ref[...] + p_ref[...]  # f32 throughout
        o_ref[...] = jnp.sin(theta).astype(o_ref.dtype)  # cast only at the store

    return kernel


def _pick_block_rows(n_rows, g, out_itemsize, vmem_budget_bytes):
    # Double-buffered working set per grid step:
    #   out block: 2 * R * 128 * out_itemsize,   x block: 2 * R * g * 4
    bytes_per_row = 2 * (_LANES * out_itemsize + g * 4)
    r_budget = max(8, (vmem_budget_bytes // bytes_per_row) // 8 * 8)
    # Keep >= 2 grid steps whenever possible so the single "parallel" grid axis
    # can be sharded across v7x's two TensorCores (harmless on v5e/v6e).
    r_half = max(8, _round_up(-(-n_rows // 2), 8))
    return int(min(r_budget, r_half))


def random_or_learned_sinusoidal_pos_emb(
    x,
    weights,
    *,
    out_dtype=jnp.float32,          # set to jnp.bfloat16 to halve HBM write bytes
    min_pallas_batch: int = 4096,   # below this the single-pass XLA fusion wins
    vmem_budget_bytes: int = 8 * 1024 * 1024,
):
    """x: (B,) float timesteps; weights: (half_dim,) parameter.

    Returns (B, 2*half_dim + 1) = [x | sin(2*pi*x*w) | cos(2*pi*x*w)],
    matching RandomOrLearnedSinusoidalPosEmb.forward.
    """
    B = int(x.shape[0])
    H = int(weights.shape[0])
    two_h = 2 * H
    x = x.astype(jnp.float32)
    # Fold 2*pi into the tiny (H,) weight vector once (parameter-side transform).
    w2pi = weights.astype(jnp.float32) * TWO_PI

    # Pallas path needs 2H to divide 128 so the row-major (B, 2H) slab packs
    # lane-densely (covers the typical diffusion configs: dim 16..128).
    # TODO(synk): add a (block_rows, 2H)-tiled variant for 2H > 128 or non-divisor dims.
    use_pallas = (two_h <= _LANES) and (_LANES % two_h == 0) and (B >= min_pallas_batch)
    if not use_pallas:
        freqs = x[:, None] * w2pi[None, :]
        return jnp.concatenate(
            (x[:, None], jnp.sin(freqs), jnp.cos(freqs)), axis=-1
        ).astype(out_dtype)

    # ---- Pallas path: lane-packed, final-layout sin|cos slab ---------------
    g = _LANES // two_h                      # batch elements packed per lane row
    n_rows = -(-B // g)                      # lane rows needed
    out_itemsize = jnp.dtype(out_dtype).itemsize
    block_rows = _pick_block_rows(n_rows, g, out_itemsize, vmem_budget_bytes)
    padded_rows = _round_up(n_rows, block_rows)
    padded_b = padded_rows * g
    grid = (padded_rows // block_rows,)

    x_p = x if padded_b == B else jnp.pad(x, (0, padded_b - B))
    x_view = x_p.reshape(padded_rows, g)     # free reshape (contiguous)

    # Constant rows: lane l holds feature c = l % 2H of batch element j = l // 2H.
    w_row = jnp.tile(jnp.concatenate((w2pi, w2pi)), g).reshape(1, _LANES)
    p_row = jnp.tile(
        jnp.concatenate(
            (jnp.zeros((H,), jnp.float32), jnp.full((H,), HALF_PI, jnp.float32))
        ),
        g,
    ).reshape(1, _LANES)
    expand = (
        (jnp.arange(_LANES, dtype=jnp.int32)[None, :] // two_h)
        == jnp.arange(g, dtype=jnp.int32)[:, None]
    ).astype(jnp.float32)                    # (g, 128) one-hot expansion matrix

    packed = pl.pallas_call(
        _make_packed_kernel(g),
        out_shape=jax.ShapeDtypeStruct((padded_rows, _LANES), out_dtype),
        grid_spec=pl.GridSpec(
            grid=grid,
            in_specs=[
                pl.BlockSpec((block_rows, g), lambda i: (i, 0)),
                pl.BlockSpec((1, _LANES), lambda i: (0, 0)),     # constant, not re-fetched
                pl.BlockSpec((1, _LANES), lambda i: (0, 0)),
                pl.BlockSpec((g, _LANES), lambda i: (0, 0)),
            ],
            out_specs=pl.BlockSpec((block_rows, _LANES), lambda i: (i, 0)),
        ),
        compiler_params=pltpu.CompilerParams(
            dimension_semantics=("parallel",),
        ),
    )(x_view, w_row, p_row, expand)

    # The (padded_rows, 128) result IS the row-major (padded_b, 2H) slab.
    sincos = packed.reshape(padded_b, two_h)[:B]
    # Single fused XLA pass: prepend the 1-column x passthrough (and drop padding rows).
    return jnp.concatenate((x[:, None].astype(out_dtype), sincos), axis=-1)


def reference(x, weights):
    x2 = x.astype(jnp.float32)[:, None]
    freqs = x2 * weights.astype(jnp.float32)[None, :] * TWO_PI
    return jnp.concatenate((x2, jnp.sin(freqs), jnp.cos(freqs)), axis=-1)


if __name__ == "__main__":
    key = jax.random.PRNGKey(0)
    kx, kw, kx2, kw2 = jax.random.split(key, 4)

    emb = jax.jit(partial(random_or_learned_sinusoidal_pos_emb, min_pallas_batch=1))

    # --- Pallas path, typical diffusion config: dim=16 -> H=8, 2H=16, G=8.
    dim = 16
    half_dim = dim // 2
    weights = jax.random.normal(kw, (half_dim,), dtype=jnp.float32)
    B = 200                                   # not a multiple of the packing -> padding path
    x = jax.random.uniform(kx, (B,), dtype=jnp.float32)  # diffusion-style t in [0, 1)
    out = jax.block_until_ready(emb(x, weights))
    ref = reference(x, weights)
    assert out.shape == (B, dim + 1), out.shape
    assert jnp.allclose(out, ref, atol=1e-4, rtol=1e-4), "mismatch vs reference (pallas, dim=16)"

    # --- Pallas path, G == 1 branch: dim=128 -> 2H=128, one batch row per lane row.
    dim2 = 128
    weights2 = jax.random.normal(kw2, (dim2 // 2,), dtype=jnp.float32)
    B2 = 72
    x2 = jax.random.uniform(kx2, (B2,), dtype=jnp.float32)
    out2 = jax.block_until_ready(emb(x2, weights2))
    assert out2.shape == (B2, dim2 + 1), out2.shape
    assert jnp.allclose(out2, reference(x2, weights2), atol=1e-4, rtol=1e-4), \
        "mismatch vs reference (pallas, dim=128)"

    # --- Fallback path: tiny batch -> single-pass XLA fusion (default gate).
    x_small = jax.random.uniform(kx, (8,), dtype=jnp.float32)
    out_small = jax.block_until_ready(
        random_or_learned_sinusoidal_pos_emb(x_small, weights)
    )
    assert out_small.shape == (8, dim + 1)
    assert jnp.allclose(out_small, reference(x_small, weights), atol=1e-4, rtol=1e-4), \
        "mismatch vs reference (fallback)"

    print("KERNEL_OK")
</pallas_src>

<mosaic_0001>
module attributes {stable_mosaic.version = 11 : i64} {
  func.func @kernel(%arg0: i32, %arg1: memref<16x8xf32, #tpu.memory_space<vmem>>, %arg2: memref<1x128xf32, #tpu.memory_space<vmem>>, %arg3: memref<1x128xf32, #tpu.memory_space<vmem>>, %arg4: memref<8x128xf32, #tpu.memory_space<vmem>>, %arg5: memref<16x128xf32, #tpu.memory_space<vmem>>) attributes {dimension_semantics = [#tpu.dimension_semantics<parallel>], iteration_bounds = array<i64: 2>, scalar_prefetch = 0 : i64, scratch_operands = 0 : i64, tpu.core_type = #tpu.core_type<tc>, window_params = [{transform_indices = @transform_0, window_bounds = array<i64: 16, 8>}, {pipeline_mode = #tpu.pipeline_mode<synchronous>, transform_indices = @transform_1, window_bounds = array<i64: 1, 128>}, {pipeline_mode = #tpu.pipeline_mode<synchronous>, transform_indices = @transform_2, window_bounds = array<i64: 1, 128>}, {pipeline_mode = #tpu.pipeline_mode<synchronous>, transform_indices = @transform_3, window_bounds = array<i64: 8, 128>}, {transform_indices = @transform_4, window_bounds = array<i64: 16, 128>}]} {
    %c0 = arith.constant 0 : index
    %c0_0 = arith.constant 0 : index
    %0 = vector.load %arg1[%c0, %c0_0] : memref<16x8xf32, #tpu.memory_space<vmem>>, vector<16x8xf32>
    %c0_1 = arith.constant 0 : index
    %c0_2 = arith.constant 0 : index
    %1 = vector.load %arg4[%c0_1, %c0_2] : memref<8x128xf32, #tpu.memory_space<vmem>>, vector<8x128xf32>
    %cst = arith.constant dense<0.000000e+00> : vector<16x128xf32>
    %2 = tpu.matmul %0, %1, %cst {dimension_numbers = #tpu.dot_dimension_numbers<[1], [0], [0], [1], [0, 0, 1, 1], [], []>, precision = #tpu.contract_precision<fp32>} : vector<16x8xf32>, vector<8x128xf32>, vector<16x128xf32> -> vector<16x128xf32>
    %c0_3 = arith.constant 0 : index
    %c0_4 = arith.constant 0 : index
    %3 = vector.load %arg2[%c0_3, %c0_4] : memref<1x128xf32, #tpu.memory_space<vmem>>, vector<1x128xf32>
    %4 = vector.broadcast %3 : vector<1x128xf32> to vector<16x128xf32>
    %5 = arith.mulf %2, %4 : vector<16x128xf32>
    %c0_5 = arith.constant 0 : index
    %c0_6 = arith.constant 0 : index
    %6 = vector.load %arg3[%c0_5, %c0_6] : memref<1x128xf32, #tpu.memory_space<vmem>>, vector<1x128xf32>
    %7 = vector.broadcast %6 : vector<1x128xf32> to vector<16x128xf32>
    %8 = arith.addf %5, %7 : vector<16x128xf32>
    %9 = math.sin %8 : vector<16x128xf32>
    %c0_7 = arith.constant 0 : index
    %c0_8 = arith.constant 0 : index
    %10 = vector.load %arg5[%c0_7, %c0_8] : memref<16x128xf32, #tpu.memory_space<vmem>>, vector<16x128xf32>
    tpu.vector_store %arg5[%c0_7, %c0_8], %9 {strides = array<i32>} : memref<16x128xf32, #tpu.memory_space<vmem>>, vector<16x128xf32>,
    return
  }
  func.func @transform_0(%arg0: i32) -> (i32, i32) {
    %c0_i32 = arith.constant 0 : i32
    %c0_i32_0 = arith.constant 0 : i32
    return %arg0, %c0_i32 : i32, i32
  }
  func.func @transform_1(%arg0: i32) -> (i32, i32) {
    %c0_i32 = arith.constant 0 : i32
    %c0_i32_0 = arith.constant 0 : i32
    %c0_i32_1 = arith.constant 0 : i32
    return %c0_i32, %c0_i32_0 : i32, i32
  }
  func.func @transform_2(%arg0: i32) -> (i32, i32) {
    %c0_i32 = arith.constant 0 : i32
    %c0_i32_0 = arith.constant 0 : i32
    %c0_i32_1 = arith.constant 0 : i32
    return %c0_i32, %c0_i32_0 : i32, i32
  }
  func.func @transform_3(%arg0: i32) -> (i32, i32) {
    %c0_i32 = arith.constant 0 : i32
    %c0_i32_0 = arith.constant 0 : i32
    %c0_i32_1 = arith.constant 0 : i32
    return %c0_i32, %c0_i32_0 : i32, i32
  }
  func.func @transform_4(%arg0: i32) -> (i32, i32) {
    %c0_i32 = arith.constant 0 : i32
    %c0_i32_0 = arith.constant 0 : i32
    return %arg0, %c0_i32 : i32, i32
  }
}

</mosaic_0001>

<llo_original>
// kernel: tile.12
$region0: #{tile.12}
  #allocation0 [shape = 's32[1]{0}', space=sflag, size = 0x4, scoped, tag = 'scoped memory for tile.12']
  %s0 = inlined_call_operand.vmem [shape: f32[16], index: 0, kind: input, shape index: {}]
  %s1 = inlined_call_operand.vmem [shape: f32[8,16], index: 1, kind: output, shape index: {}]
  // Predicated region
  $region2: #{tile.12} parent=0 // pred_check
    _
  $region3: #{tile.12} parent=0 // pred_check_branch
    %3 = sbr.rel (0) target = $region5
  $region4: #{tile.12} parent=0 // pred_region
    _
  $region5: #{tile.12} parent=0 // pred_fallthru
    _
  %v4 = vld [vmem:[%s0] ss:$0 sm:$0xff]
  %5 = vst [vmem:[%s1] sm:$0xff] %v4

// kernel: tile.13
$region0: #{tile.13}
  %s0 = inlined_call_operand.vmem [shape: f32[8,16], index: 0, kind: input, shape index: {}]
  %s1 = inlined_call_operand.vmem [shape: f32[1,128], index: 1, kind: output, shape index: {}]
  $region1: #{tile.13} parent=0
    #allocation0 [shape = 'u8[4096]{0}', space=vmem, size = 0x1000, scoped, tag = 'scoped mem for output reshape']
    %v2 = vld [vmem:[%s0] sm:$0x1]
    %vm3 = vcmask 130048
    %4 = vst.msk [vmem:[#allocation0] sm:$0x1] %vm3, %v2
    %s5 = scalar_lea.vmem %s0, 7
    %v6 = vld [vmem:[%s5] sm:$0x1]
    %7 = vrot.lane.b32.xlu0 %v6, 112
    %v8 = vpop.permute.xlu0 %7
    %vm9 = vcmask 1048448
    %10 = vst.msk [vmem:[#allocation0] sm:$0x1] %vm9, %v8
    %s11 = scalar_lea.vmem %s0, 6
    %v12 = vld [vmem:[%s11] sm:$0x1]
    %13 = vrot.lane.b32.xlu0 %v12, 96
    %v14 = vpop.permute.xlu0 %13
    %vm15 = vcmask 917248
    %16 = vst.msk [vmem:[#allocation0] sm:$0x1] %vm15, %v14
    %s17 = scalar_lea.vmem %s0, 5
    %v18 = vld [vmem:[%s17] sm:$0x1]
    %19 = vrot.lane.b32.xlu0 %v18, 80
    %v20 = vpop.permute.xlu0 %19
    %vm21 = vcmask 786048
    %22 = vst.msk [vmem:[#allocation0] sm:$0x1] %vm21, %v20
    %s23 = scalar_lea.vmem %s0, 4
    %v24 = vld [vmem:[%s23] sm:$0x1]
    %25 = vrot.lane.b32.xlu0 %v24, 64
    %v26 = vpop.permute.xlu0 %25
    %vm27 = vcmask 654848
    %28 = vst.msk [vmem:[#allocation0] sm:$0x1] %vm27, %v26
    %s29 = scalar_lea.vmem %s0, 3
    %v30 = vld [vmem:[%s29] sm:$0x1]
    %31 = vrot.lane.b32.xlu0 %v30, 48
    %v32 = vpop.permute.xlu0 %31
    %vm33 = vcmask 523648
    %34 = vst.msk [vmem:[#allocation0] sm:$0x1] %vm33, %v32
    %s35 = scalar_lea.vmem %s0, 2
    %v36 = vld [vmem:[%s35] sm:$0x1]
    %37 = vrot.lane.b32.xlu0 %v36, 32
    %v38 = vpop.permute.xlu0 %37
    %vm39 = vcmask 392448
    %40 = vst.msk [vmem:[#allocation0] sm:$0x1] %vm39, %v38
    %s41 = scalar_lea.vmem %s0, 1
    %v42 = vld [vmem:[%s41] sm:$0x1]
    %43 = vrot.lane.b32.xlu0 %v42, 16
    %v44 = vpop.permute.xlu0 %43
    %vm45 = vcmask 261248
    %46 = vst.msk [vmem:[#allocation0] sm:$0x1] %vm45, %v44
    %s48 = ssub.s32 2, 1
    %v49 = vld [vmem:[#allocation0] sm:%s48]
    %s51 = ssub.s32 2, 1
    %52 = vst [vmem:[%s1] sm:%s51] %v49

// kernel: random_or_learned_sinusoidal_pos_emb.1
$region0: #{random_or_learned_sinusoidal_pos_emb.1}
  #allocation0 [shape = 'u32[]', space=smem, size = 0x4, offset = 0x4, fixed_abs, tag = 'smem constant byte address 0x4 - core index']
  #allocation1 [shape = 'u32[72,128]{1,0:T(1,128)}', space=vmem, size = 0x9000, scoped, tag = 'internal scratch']
  %s0 = inlined_call_operand.vmem [shape: f32[32,8], index: 0, kind: input, shape index: {}]
  %s1 = inlined_call_operand.vmem [shape: f32[1,128], index: 1, kind: input, shape index: {}]
  %s2 = inlined_call_operand.vmem [shape: f32[1,128], index: 2, kind: input, shape index: {}]
  %s3 = inlined_call_operand.vmem [shape: f32[8,128], index: 3, kind: input, shape index: {}]
  %s4 = inlined_call_operand.vmem [shape: f32[32,128], index: 4, kind: output, shape index: {}]
  %s5 = sld [smem:[#allocation0]]
  $region49: #{random_or_learned_sinusoidal_pos_emb.1} parent=0
    _
  %s7 = ssub.s32 1, %s5
  %s8 = scalar_select 0, %s7, %s5
  loop: start=0, step=1, limit=4
  $region2: #{random_or_learned_sinusoidal_pos_emb.1} parent=0 // loop_pre_header
    _
  $region3: #{random_or_learned_sinusoidal_pos_emb.1} parent=0 // loop_header
    %s10 = sphi 0, %s14
    %p11 = scmp.ge.s32.totalorder %s10, 4
    %s20 = sphi 0, %s22
    %s23 = sphi 0, %s20
    %s24 = sphi 0, %s23
    %s40 = sphi 0, %s24
    %s44 = sphi 0, %s44
    %s46 = sphi 0, %s44
    %s47 = sphi 0, %s46
    %s61 = sphi 0, %s47
    %s65 = sphi 0, %s65
    %s67 = sphi 0, %s65
    %s68 = sphi 0, %s67
    %s82 = sphi 0, %s68
    %s86 = sphi 0, %s86
    %s88 = sphi 0, %s86
    %s89 = sphi 0, %s88
    %s103 = sphi 0, %s89
    %s109 = sphi 0, %s111
    %s112 = sphi 0, %s109
    %s113 = sphi 0, %s112
    %s129 = sphi 0, %s113
  $region4: #{random_or_learned_sinusoidal_pos_emb.1} parent=0 // loop_header_branch
    %13 = sbr.rel (%p11) target = $region8
  $region5: #{random_or_learned_sinusoidal_pos_emb.1} parent=0 // loop_body
    %s15 = ssub.s32 %s10, 1
    %s16 = ssub.s32 %s10, 2
    %s17 = sadd.s32 %s10, 1
    %s18 = ssub.s32 %s10, %s17
    %p19 = scmp.eq.s32.totalorder %s18, 0
    %s21 = sadd.s32 %s20, 1
    %s22 = scalar_select %p19, %s20, %s21
    %p25 = pneg %p19
    %p26 = scmp.eq.s32.totalorder %s10, 1
    %p27 = por %p25, %p26
    %p28 = scmp.ne.s32.totalorder %s20, %s23
    %p29 = scmp.eq.s32.totalorder %s10, 0
    %p30 = por %p28, %p29
    %p31 = scmp.ne.s32.totalorder %s20, %s23
    %p32 = scmp.eq.s32.totalorder %s15, 1
    %p33 = por %p31, %p32
    %p34 = scmp.ne.s32.totalorder %s23, %s24
    %p35 = scmp.eq.s32.totalorder %s15, 0
    %p36 = por %p34, %p35
    %p37 = scmp.ne.s32.totalorder %s23, %s24
    %p38 = scmp.eq.s32.totalorder %s16, 1
    %p39 = por %p37, %p38
    %p41 = scmp.ne.s32.totalorder %s24, %s40
    %p42 = scmp.eq.s32.totalorder %s16, 0
    %p43 = por %p41, %p42
    %s45 = sadd.s32 %s44, 1
    %p48 = scmp.eq.s32.totalorder %s10, 1
    %p49 = scmp.ne.s32.totalorder %s44, %s46
    %p50 = scmp.eq.s32.totalorder %s10, 0
    %p51 = por %p49, %p50
    %p52 = scmp.ne.s32.totalorder %s44, %s46
    %p53 = scmp.eq.s32.totalorder %s15, 1
    %p54 = por %p52, %p53
    %p55 = scmp.ne.s32.totalorder %s46, %s47
    %p56 = scmp.eq.s32.totalorder %s15, 0
    %p57 = por %p55, %p56
    %p58 = scmp.ne.s32.totalorder %s46, %s47
    %p59 = scmp.eq.s32.totalorder %s16, 1
    %p60 = por %p58, %p59
    %p62 = scmp.ne.s32.totalorder %s47, %s61
    %p63 = scmp.eq.s32.totalorder %s16, 0
    %p64 = por %p62, %p63
    %s66 = sadd.s32 %s65, 1
    %p69 = scmp.eq.s32.totalorder %s10, 1
    %p70 = scmp.ne.s32.totalorder %s65, %s67
    %p71 = scmp.eq.s32.totalorder %s10, 0
    %p72 = por %p70, %p71
    %p73 = scmp.ne.s32.totalorder %s65, %s67
    %p74 = scmp.eq.s32.totalorder %s15, 1
    %p75 = por %p73, %p74
    %p76 = scmp.ne.s32.totalorder %s67, %s68
    %p77 = scmp.eq.s32.totalorder %s15, 0
    %p78 = por %p76, %p77
    %p79 = scmp.ne.s32.totalorder %s67, %s68
    %p80 = scmp.eq.s32.totalorder %s16, 1
    %p81 = por %p79, %p80
    %p83 = scmp.ne.s32.totalorder %s68, %s82
    %p84 = scmp.eq.s32.totalorder %s16, 0
    %p85 = por %p83, %p84
    %s87 = sadd.s32 %s86, 1
    %p90 = scmp.eq.s32.totalorder %s10, 1
    %p91 = scmp.ne.s32.totalorder %s86, %s88
    %p92 = scmp.eq.s32.totalorder %s10, 0
    %p93 = por %p91, %p92
    %p94 = scmp.ne.s32.totalorder %s86, %s88
    %p95 = scmp.eq.s32.totalorder %s15, 1
    %p96 = por %p94, %p95
    %p97 = scmp.ne.s32.totalorder %s88, %s89
    %p98 = scmp.eq.s32.totalorder %s15, 0
    %p99 = por %p97, %p98
    %p100 = scmp.ne.s32.totalorder %s88, %s89
    %p101 = scmp.eq.s32.totalorder %s16, 1
    %p102 = por %p100, %p101
    %p104 = scmp.ne.s32.totalorder %s89, %s103
    %p105 = scmp.eq.s32.totalorder %s16, 0
    %p106 = por %p104, %p105
    %s107 = ssub.s32 %s10, %s17
    %p108 = scmp.eq.s32.totalorder %s107, 0
    %s110 = sadd.s32 %s109, 1
    %s111 = scalar_select %p108, %s109, %s110
    %p114 = pneg %p108
    %p115 = scmp.eq.s32.totalorder %s10, 1
    %p116 = por %p114, %p115
    %p117 = scmp.ne.s32.totalorder %s109, %s112
    %p118 = scmp.eq.s32.totalorder %s10, 0
    %p119 = por %p117, %p118
    %p120 = scmp.ne.s32.totalorder %s109, %s112
    %p121 = scmp.eq.s32.totalorder %s15, 1
    %p122 = por %p120, %p121
    %p123 = scmp.ne.s32.totalorder %s112, %s113
    %p124 = scmp.eq.s32.totalorder %s15, 0
    %p125 = por %p123, %p124
    %p126 = scmp.ne.s32.totalorder %s112, %s113
    %p127 = scmp.eq.s32.totalorder %s16, 1
    %p128 = por %p126, %p127
    %p130 = scmp.ne.s32.totalorder %s113, %s129
    %p131 = scmp.eq.s32.totalorder %s16, 0
    %p132 = por %p130, %p131
    %p133 = scmp.le.s32.totalorder 1, %s10
    %p134 = scmp.lt.s32.totalorder %s10, 3
    %p135 = pnand %p133, %p134
    %p136 = pneg %p135
    // Predicated region
    $region9: #{random_or_learned_sinusoidal_pos_emb.1} parent=5 // pred_check
      _
    $region10: #{random_or_learned_sinusoidal_pos_emb.1} parent=5 // pred_check_branch
      %138 = sbr.rel (%p135) target = $region12
    $region11: #{random_or_learned_sinusoidal_pos_emb.1} parent=5 // pred_region
      %s139 = ssub.s32 %s10, 1
      // Predicated region
      $region13: #{random_or_learned_sinusoidal_pos_emb.1} parent=11 // pred_check
        %p140 = pneg %p57
      $region14: #{random_or_learned_sinusoidal_pos_emb.1} parent=11 // pred_check_branch
        %142 = sbr.rel (%p140) target = $region16
      $region15: #{random_or_learned_sinusoidal_pos_emb.1} parent=11 // pred_region
        _
      $region16: #{random_or_learned_sinusoidal_pos_emb.1} parent=11 // pred_fallthru
        _
      // Predicated region
      $region17: #{random_or_learned_sinusoidal_pos_emb.1} parent=11 // pred_check
        %p143 = pneg %p78
      $region18: #{random_or_learned_sinusoidal_pos_emb.1} parent=11 // pred_check_branch
        %145 = sbr.rel (%p143) target = $region20
      $region19: #{random_or_learned_sinusoidal_pos_emb.1} parent=11 // pred_region
        _
      $region20: #{random_or_learned_sinusoidal_pos_emb.1} parent=11 // pred_fallthru
        _
      // Predicated region
      $region21: #{random_or_learned_sinusoidal_pos_emb.1} parent=11 // pred_check
        %p146 = pneg %p99
      $region22: #{random_or_learned_sinusoidal_pos_emb.1} parent=11 // pred_check_branch
        %148 = sbr.rel (%p146) target = $region24
      $region23: #{random_or_learned_sinusoidal_pos_emb.1} parent=11 // pred_region
        _
      $region24: #{random_or_learned_sinusoidal_pos_emb.1} parent=11 // pred_fallthru
        _
    $region12: #{random_or_learned_sinusoidal_pos_emb.1} parent=5 // pred_fallthru
      _
    %p149 = scmp.lt.s32.totalorder %s10, 2
    // Predicated region
    $region25: #{random_or_learned_sinusoidal_pos_emb.1} parent=5 // pred_check
      %p150 = pneg %p149
    $region26: #{random_or_learned_sinusoidal_pos_emb.1} parent=5 // pred_check_branch
      %152 = sbr.rel (%p150) target = $region28
    $region27: #{random_or_learned_sinusoidal_pos_emb.1} parent=5 // pred_region
      // Predicated region
      $region29: #{random_or_learned_sinusoidal_pos_emb.1} parent=27 // pred_check
        %p153 = pneg %p30
      $region30: #{random_or_learned_sinusoidal_pos_emb.1} parent=27 // pred_check_branch
        %155 = sbr.rel (%p153) target = $region32
      $region31: #{random_or_learned_sinusoidal_pos_emb.1} parent=27 // pred_region
        %s156 = smul.u32 2, %s10
        %p157 = scmp.lt.s32.totalorder %s156, 3
        %s158 = scalar_select %p157, %s156, 3
        %s159 = smul.addr %s158, 8
        %s160 = scalar_lea.vmem %s0, %s159
        %s161 = smul.u32 2, %s10
      $region32: #{random_or_learned_sinusoidal_pos_emb.1} parent=27 // pred_fallthru
        _
    $region28: #{random_or_learned_sinusoidal_pos_emb.1} parent=5 // pred_fallthru
      _
    %p162 = scmp.le.s32.totalorder 1, %s10
    %p163 = scmp.lt.s32.totalorder %s10, 3
    %p164 = pnand %p162, %p163
    %p165 = pneg %p164
    // Predicated region
    $region33: #{random_or_learned_sinusoidal_pos_emb.1} parent=5 // pred_check
      _
    $region34: #{random_or_learned_sinusoidal_pos_emb.1} parent=5 // pred_check_branch
      %167 = sbr.rel (%p164) target = $region36
    $region35: #{random_or_learned_sinusoidal_pos_emb.1} parent=5 // pred_region
      %s168 = ssub.s32 %s10, 1
      %s169 = smul.u32 2, %s15
      %p170 = scmp.lt.s32.totalorder %s169, 3
      %s171 = scalar_select %p170, %s169, 3
      %s172 = smul.addr %s171, 8
      %s173 = scalar_lea.vmem %s0, %s172
      %p174 = pneg %p36
      %p175 = pneg %p33
      %p176 = pneg %p57
      %p177 = pneg %p54
      %p178 = pneg %p78
      %p179 = pneg %p75
      %p180 = pneg %p99
      %p181 = pneg %p96
      %p182 = pneg %p125
      %p183 = pneg %p122
      %s184 = smul.u32 2, %s15
      %p185 = scmp.lt.s32.totalorder %s184, 3
      %s186 = scalar_select %p185, %s184, 3
      %s187 = smul.addr %s186, 8
      %s188 = scalar_lea.vmem %s4, %s187
      %s189 = smul.u32 2, %s15
      %p190 = scmp.lt.s32.totalorder %s189, 3
      %s191 = scalar_select %p190, %s189, 3
      %s192 = smul.addr %s191, 8
      %s193 = scalar_lea.vmem %s0, %s192
      %s194 = smul.u32 2, %s15
      %s195 = smul.u32 2, %s15
      %p196 = scmp.lt.s32.totalorder %s195, 3
      %s197 = scalar_select %p196, %s195, 3
      %s198 = smul.addr %s197, 8
      %s199 = scalar_lea.vmem %s4, %s198
      %s200 = smul.u32 2, %s15
      %v201 = vld [vmem:[%s193] sm:$0xff]
      %v202 = vld [vmem:[%s193 + $0x8] sm:$0xff]
      %v203 = vld [vmem:[%s3] sm:$0xff]
      %vm204 = vcmask 64512
      %v206 = vsel %vm204, %v201, 0
      %v209 = vsel %vm204, %v202, 0
      %211 = vmatpush.msra.mxu0 0.0
      %212 = vmatpush.msra.mxu0 0.0
      %213 = vmatpush.msra.mxu0 0.0
      %214 = vmatpush.msra.mxu0 0.0
      %215 = vmatpush.msra.mxu0 0.0
      %216 = vmatpush.msra.mxu0 0.0
      %217 = vmatpush.msra.mxu0 0.0
      %218 = vmatpush.msra.mxu0 0.0
      %219 = vmatpush.msra.mxu0 0.0
      %220 = vmatpush.msra.mxu0 0.0
      %221 = vmatpush.msra.mxu0 0.0
      %222 = vmatpush.msra.mxu0 0.0
      %223 = vmatpush.msra.mxu0 0.0
      %224 = vmatpush.msra.mxu0 0.0
      %225 = vmatpush.msra.mxu0 0.0
      %v226 = vand.u32 %v203, 4294901760
      %227 = vmatpush.msra.mxu0 %v226
      %v228 = vand.u32 %v206, 4294901760
      %v229 = vsub.f32 %v206, %v228
      %v230 = vand.u32 %v229, 4294901760
      %v231 = vsub.f32 %v229, %v230
      %v232 = vand.u32 %v231, 4294901760
      %233 = vmatmul.f32.gmra.mxu0 %v232
      %v234 = vpop.f32.mrf.mxu0
      %v235 = vadd.f32 0.0, %v234
      %v236 = vand.u32 %v209, 4294901760
      %v237 = vsub.f32 %v209, %v236
      %v238 = vand.u32 %v237, 4294901760
      %v239 = vsub.f32 %v237, %v238
      %v240 = vand.u32 %v239, 4294901760
      %241 = vmatmul.f32.gmra.mxu0 %v240
      %v242 = vpop.f32.mrf.mxu0
      %v243 = vadd.f32 0.0, %v242
      %244 = vdwg.mxu0
      %245 = vmatpush.msra.mxu0 0.0
      %246 = vmatpush.msra.mxu0 0.0
      %247 = vmatpush.msra.mxu0 0.0
      %248 = vmatpush.msra.mxu0 0.0
      %249 = vmatpush.msra.mxu0 0.0
      %250 = vmatpush.msra.mxu0 0.0
      %251 = vmatpush.msra.mxu0 0.0
      %252 = vmatpush.msra.mxu0 0.0
      %253 = vmatpush.msra.mxu0 0.0
      %254 = vmatpush.msra.mxu0 0.0
      %255 = vmatpush.msra.mxu0 0.0
      %256 = vmatpush.msra.mxu0 0.0
      %257 = vmatpush.msra.mxu0 0.0
      %258 = vmatpush.msra.mxu0 0.0
      %259 = vmatpush.msra.mxu0 0.0
      %v260 = vand.u32 %v203, 4294901760
      %v261 = vsub.f32 %v203, %v260
      %v262 = vand.u32 %v261, 4294901760
      %v263 = vsub.f32 %v261, %v262
      %v264 = vand.u32 %v263, 4294901760
      %265 = vmatpush.msra.mxu0 %v264
      %v266 = vand.u32 %v206, 4294901760
      %267 = vmatmul.f32.gmra.mxu0 %v266
      %v268 = vpop.f32.mrf.mxu0
      %v269 = vadd.f32 %v235, %v268
      %v270 = vand.u32 %v209, 4294901760
      %271 = vmatmul.f32.gmra.mxu0 %v270
      %v272 = vpop.f32.mrf.mxu0
      %v273 = vadd.f32 %v243, %v272
      %274 = vdwg.mxu0
      %275 = vmatpush.msra.mxu0 0.0
      %276 = vmatpush.msra.mxu0 0.0
      %277 = vmatpush.msra.mxu0 0.0
      %278 = vmatpush.msra.mxu0 0.0
      %279 = vmatpush.msra.mxu0 0.0
      %280 = vmatpush.msra.mxu0 0.0
      %281 = vmatpush.msra.mxu0 0.0
      %282 = vmatpush.msra.mxu0 0.0
      %283 = vmatpush.msra.mxu0 0.0
      %284 = vmatpush.msra.mxu0 0.0
      %285 = vmatpush.msra.mxu0 0.0
      %286 = vmatpush.msra.mxu0 0.0
      %287 = vmatpush.msra.mxu0 0.0
      %288 = vmatpush.msra.mxu0 0.0
      %289 = vmatpush.msra.mxu0 0.0
      %v290 = vand.u32 %v203, 4294901760
      %v291 = vsub.f32 %v203, %v290
      %292 = vmatpush.msra.mxu0 %v291
      %v293 = vand.u32 %v206, 4294901760
      %v294 = vsub.f32 %v206, %v293
      %295 = vmatmul.f32.gmra.mxu0 %v294
      %v296 = vpop.f32.mrf.mxu0
      %v297 = vadd.f32 %v269, %v296
      %v298 = vand.u32 %v209, 4294901760
      %v299 = vsub.f32 %v209, %v298
      %300 = vmatmul.f32.gmra.mxu0 %v299
      %v301 = vpop.f32.mrf.mxu0
      %v302 = vadd.f32 %v273, %v301
      %303 = vdwg.mxu0
      %304 = vmatpush.msra.mxu0 0.0
      %305 = vmatpush.msra.mxu0 0.0
      %306 = vmatpush.msra.mxu0 0.0
      %307 = vmatpush.msra.mxu0 0.0
      %308 = vmatpush.msra.mxu0 0.0
      %309 = vmatpush.msra.mxu0 0.0
      %310 = vmatpush.msra.mxu0 0.0
      %311 = vmatpush.msra.mxu0 0.0
      %312 = vmatpush.msra.mxu0 0.0
      %313 = vmatpush.msra.mxu0 0.0
      %314 = vmatpush.msra.mxu0 0.0
      %315 = vmatpush.msra.mxu0 0.0
      %316 = vmatpush.msra.mxu0 0.0
      %317 = vmatpush.msra.mxu0 0.0
      %318 = vmatpush.msra.mxu0 0.0
      %v319 = vand.u32 %v203, 4294901760
      %320 = vmatpush.msra.mxu0 %v319
      %v321 = vand.u32 %v206, 4294901760
      %v322 = vsub.f32 %v206, %v321
      %v323 = vand.u32 %v322, 4294901760
      %324 = vmatmul.f32.gmra.mxu0 %v323
      %v325 = vpop.f32.mrf.mxu0
      %v326 = vadd.f32 %v297, %v325
      %v327 = vand.u32 %v209, 4294901760
      %v328 = vsub.f32 %v209, %v327
      %v329 = vand.u32 %v328, 4294901760
      %330 = vmatmul.f32.gmra.mxu0 %v329
      %v331 = vpop.f32.mrf.mxu0
      %v332 = vadd.f32 %v302, %v331
      %333 = vdwg.mxu0
      %334 = vmatpush.msra.mxu0 0.0
      %335 = vmatpush.msra.mxu0 0.0
      %336 = vmatpush.msra.mxu0 0.0
      %337 = vmatpush.msra.mxu0 0.0
      %338 = vmatpush.msra.mxu0 0.0
      %339 = vmatpush.msra.mxu0 0.0
      %340 = vmatpush.msra.mxu0 0.0
      %341 = vmatpush.msra.mxu0 0.0
      %342 = vmatpush.msra.mxu0 0.0
      %343 = vmatpush.msra.mxu0 0.0
      %344 = vmatpush.msra.mxu0 0.0
      %345 = vmatpush.msra.mxu0 0.0
      %346 = vmatpush.msra.mxu0 0.0
      %347 = vmatpush.msra.mxu0 0.0
      %348 = vmatpush.msra.mxu0 0.0
      %v349 = vand.u32 %v203, 4294901760
      %v350 = vsub.f32 %v203, %v349
      %v351 = vand.u32 %v350, 4294901760
      %352 = vmatpush.msra.mxu0 %v351
      %v353 = vand.u32 %v206, 4294901760
      %354 = vmatmul.f32.gmra.mxu0 %v353
      %v355 = vpop.f32.mrf.mxu0
      %v356 = vadd.f32 %v326, %v355
      %v357 = vand.u32 %v209, 4294901760
      %358 = vmatmul.f32.gmra.mxu0 %v357
      %v359 = vpop.f32.mrf.mxu0
      %v360 = vadd.f32 %v332, %v359
      %361 = vdwg.mxu0
      %362 = vmatpush.msra.mxu0 0.0
      %363 = vmatpush.msra.mxu0 0.0
      %364 = vmatpush.msra.mxu0 0.0
      %365 = vmatpush.msra.mxu0 0.0
      %366 = vmatpush.msra.mxu0 0.0
      %367 = vmatpush.msra.mxu0 0.0
      %368 = vmatpush.msra.mxu0 0.0
      %369 = vmatpush.msra.mxu0 0.0
      %370 = vmatpush.msra.mxu0 0.0
      %371 = vmatpush.msra.mxu0 0.0
      %372 = vmatpush.msra.mxu0 0.0
      %373 = vmatpush.msra.mxu0 0.0
      %374 = vmatpush.msra.mxu0 0.0
      %375 = vmatpush.msra.mxu0 0.0
      %376 = vmatpush.msra.mxu0 0.0
      %v377 = vand.u32 %v203, 4294901760
      %378 = vmatpush.msra.mxu0 %v377
      %v379 = vand.u32 %v206, 4294901760
      %380 = vmatmul.f32.gmra.mxu0 %v379
      %v381 = vpop.f32.mrf.mxu0
      %v382 = vadd.f32 %v356, %v381
      %v383 = vand.u32 %v209, 4294901760
      %384 = vmatmul.f32.gmra.mxu0 %v383
      %v385 = vpop.f32.mrf.mxu0
      %v386 = vadd.f32 %v360, %v385
      %387 = vdwg.mxu0
      %v388 = vld [vmem:[%s1] sm:$0x1]
      %v390 = vperm.slane %v388, 0
      %v392 = vmul.f32 %v382, %v390
      %v393 = vmul.f32 %v386, %v390
      %v394 = vld [vmem:[%s2] sm:$0x1]
      %v396 = vperm.slane %v394, 0
      %v398 = vadd.f32 %v392, %v396
      %v399 = vadd.f32 %v393, %v396
      %v400 = vand.u32 2147483647, %v398
      %vm401 = vcmp.le.f32.partialorder %v400, 0.7853982
      %vm402 = vcmp.lt.s32.totalorder %v398, 0
      %v403 = vand.u32 %v398, 2139095040
      %v404 = vshrl.u32 %v403, 23
      %v405 = vsub.s32 %v404, 127
      %v406 = vand.u32 2147483647, %v398
      %v407 = vand.u32 %v406, 8388607
      %v408 = vor.u32 %v407, 8388608
      %v409 = vsub.s32 0, %v408
      %v410 = vadd.s32 %v405, 1
      %vm411 = vcmp.gt.s32.totalorder %v410, 0
      %v412 = vsel %vm411, %v410, 0
      %v413 = vshrl.u32 %v412, 5
      %v414 = vand.u32 %v412, 31
      %v415 = vsub.s32 32, %v414
      %v416 = vshrl.u32 683565275, %v415
      %v417 = vshll.u32 683565275, %v414
      %v418 = vshrl.u32 2475754826, %v415
      %v419 = vor.u32 %v417, %v418
      %v420 = vshll.u32 2475754826, %v414
      %v421 = vshrl.u32 2131351028, %v415
      %v422 = vor.u32 %v420, %v421
      %v423 = vshll.u32 2131351028, %v414
      %v424 = vshrl.u32 2102212464, %v415
      %v425 = vor.u32 %v423, %v424
      %v426 = vshll.u32 2102212464, %v414
      %v427 = vshrl.u32 920167782, %v415
      %v428 = vor.u32 %v426, %v427
      %v429 = vshll.u32 920167782, %v414
      %v430 = vshrl.u32 1326507024, %v415
      %v431 = vor.u32 %v429, %v430
      %vm432 = vcmp.lt.s32.totalorder %v413, 1
      %vm433 = vcmp.lt.s32.totalorder %v413, 2
      %vm434 = vcmp.lt.s32.totalorder %v413, 3
      %vm435 = vcmp.lt.s32.totalorder %v413, 4
      %v436 = vsel %vm432, %v416, %v419
      %v437 = vsel %vm435, %v425, 2102212464
      %v438 = vsel %vm434, %v422, %v437
      %v439 = vsel %vm433, %v436, %v438
      %v440 = vsel %vm432, %v419, %v422
      %v441 = vsel %vm435, %v428, 920167782
      %v442 = vsel %vm434, %v425, %v441
      %v443 = vsel %vm433, %v440, %v442
      %v444 = vsel %vm432, %v422, %v425
      %v445 = vsel %vm435, %v431, 1326507024
      %v446 = vsel %vm434, %v428, %v445
      %v447 = vsel %vm433, %v444, %v446
      %v448 = vshll.u32 %v408, 8
      %v449 = vand.u32 %v448, 65535
      %v450 = vshrl.u32 %v448, 16
      %v451 = vand.u32 %v447, 65535
      %v452 = vshrl.u32 %v447, 16
      %v453 = vmul.u32 %v449, %v451
      %v454 = vmul.u32 %v449, %v452
      %v455 = vmul.u32 %v450, %v451
      %v456 = vmul.u32 %v450, %v452
      %v457 = vshll.u32 %v454, 16
      %v458 = vshrl.u32 %v454, 16
      %v459 = vshll.u32 %v455, 16
      %v460 = vshrl.u32 %v455, 16
      %vm461 = vc.u32 %v453, %v457
      %v462 = vsel %vm461, 1, 0
      %v463 = vadd.s32 %v453, %v457
      %v464 = vadd.s32 %v456, %v462
      %vm465 = vc.u32 %v463, %v459
      %v466 = vsel %vm465, 1, 0
      %v467 = vadd.s32 %v463, %v459
      %v468 = vadd.s32 %v464, %v466
      %v469 = vadd.s32 %v468, %v458
      %v470 = vadd.s32 %v469, %v460
      %v471 = vand.u32 %v448, 65535
      %v472 = vshrl.u32 %v448, 16
      %v473 = vand.u32 %v443, 65535
      %v474 = vshrl.u32 %v443, 16
      %v475 = vmul.u32 %v471, %v473
      %v476 = vmul.u32 %v471, %v474
      %v477 = vmul.u32 %v472, %v473
      %v478 = vmul.u32 %v472, %v474
      %v479 = vshll.u32 %v476, 16
      %v480 = vshrl.u32 %v476, 16
      %v481 = vshll.u32 %v477, 16
      %v482 = vshrl.u32 %v477, 16
      %vm483 = vc.u32 %v475, %v479
      %v484 = vsel %vm483, 1, 0
      %v485 = vadd.s32 %v475, %v479
      %v486 = vadd.s32 %v478, %v484
      %vm487 = vc.u32 %v485, %v481
      %v488 = vsel %vm487, 1, 0
      %v489 = vadd.s32 %v485, %v481
      %v490 = vadd.s32 %v486, %v488
      %v491 = vadd.s32 %v490, %v480
      %v492 = vadd.s32 %v491, %v482
      %v493 = vmul.u32 %v448, %v439
      %v494 = vadd.s32 %v470, %v489
      %vm495 = vc.u32 %v470, %v489
      %v496 = vadd.s32 %v492, 1
      %v497 = vsel %vm495, %v496, %v492
      %v498 = vadd.s32 %v493, %v497
      %v499 = vadd.s32 %v498, 536870912
      %v500 = vshrl.u32 %v499, 30
      %v501 = vshll.u32 %v500, 30
      %v502 = vsub.s32 %v498, %v501
      %vm503 = vcmp.lt.s32.totalorder %v502, 0
      %v504 = vsub.s32 0, %v502
      %v505 = vsel %vm503, %v504, %v502
      %v506 = vclz %v505
      %v507 = vsub.s32 %v506, 2
      %vm508 = vcmp.gt.s32.totalorder 0, %v507
      %v509 = vsel %vm508, 0, %v507
      %v510 = vsub.s32 32, %v509
      %v511 = vshll.u32 %v502, %v509
      %v512 = vshrl.u32 %v494, %v510
      %v513 = vor.u32 %v511, %v512
      %v514 = vsub.s32 4294967266, %v509
      %v515 = vadd.s32 %v514, 127
      %v516 = vshll.u32 %v515, 23
      %v517 = vor.u32 4788187, %v516
      %v518 = vand.u32 2147483647, %v517
      %v520 = vcvt.s32.f32 %v513
      %v521 = vmul.f32 %v520, %v518
      %v522 = vxor.u32 %v521, 2147483648
      %v523 = vsel %vm402, %v522, %v521
      %v524 = vsub.s32 4, %v500
      %v525 = vsel %vm402, %v524, %v500
      %v526 = vsel %vm401, %v398, %v523
      %v527 = vsel %vm401, 0, %v525
      %v528 = vmul.f32 %v526, %v526
      %v529 = vmul.f32 %v528, -0.001358992
      %v530 = vadd.f32 %v529, 0.041655596
      %v531 = vmul.f32 %v528, %v530
      %v532 = vadd.f32 %v531, -0.4999988
      %v533 = vmul.f32 %v528, %v532
      %v534 = vadd.f32 1.0, %v533
      %v535 = vmul.f32 %v526, %v526
      %v536 = vmul.f32 %v535, -0.00019511016
      %v537 = vadd.f32 %v536, 0.008332121
      %v538 = vmul.f32 %v535, %v537
      %v539 = vadd.f32 %v538, -0.16666654
      %v540 = vmul.f32 %v535, %v539
      %v541 = vadd.f32 %v540, 1.0
      %v542 = vmul.f32 %v541, %v526
      %vm543 = vweird.f32 %v398
      %v544 = vadd.s32 %v527, 3
      %v545 = vand.u32 %v544, 3
      %vm546 = vcmp.lt.s32.totalorder %v545, 2
      %vm547 = vcmp.eq.s32.totalorder %v545, 0
      %v548 = vxor.u32 %v542, 2147483648
      %v549 = vsel %vm547, %v534, %v548
      %vm550 = vcmp.eq.s32.totalorder %v545, 2
      %v551 = vxor.u32 %v534, 2147483648
      %v552 = vsel %vm550, %v551, %v542
      %v553 = vsel %vm546, %v549, %v552
      %v554 = vsel %vm543, nan, %v553
      %v555 = vand.u32 2147483647, %v399
      %vm556 = vcmp.le.f32.partialorder %v555, 0.7853982
      %vm557 = vcmp.lt.s32.totalorder %v399, 0
      %v558 = vand.u32 %v399, 2139095040
      %v559 = vshrl.u32 %v558, 23
      %v560 = vsub.s32 %v559, 127
      %v561 = vand.u32 2147483647, %v399
      %v562 = vand.u32 %v561, 8388607
      %v563 = vor.u32 %v562, 8388608
      %v564 = vsub.s32 0, %v563
      %v565 = vadd.s32 %v560, 1
      %vm566 = vcmp.gt.s32.totalorder %v565, 0
      %v567 = vsel %vm566, %v565, 0
      %v568 = vshrl.u32 %v567, 5
      %v569 = vand.u32 %v567, 31
      %v570 = vsub.s32 32, %v569
      %v571 = vshrl.u32 683565275, %v570
      %v572 = vshll.u32 683565275, %v569
      %v573 = vshrl.u32 2475754826, %v570
      %v574 = vor.u32 %v572, %v573
      %v575 = vshll.u32 2475754826, %v569
      %v576 = vshrl.u32 2131351028, %v570
      %v577 = vor.u32 %v575, %v576
      %v578 = vshll.u32 2131351028, %v569
      %v579 = vshrl.u32 2102212464, %v570
      %v580 = vor.u32 %v578, %v579
      %v581 = vshll.u32 2102212464, %v569
      %v582 = vshrl.u32 920167782, %v570
      %v583 = vor.u32 %v581, %v582
      %v584 = vshll.u32 920167782, %v569
      %v585 = vshrl.u32 1326507024, %v570
      %v586 = vor.u32 %v584, %v585
      %vm587 = vcmp.lt.s32.totalorder %v568, 1
      %vm588 = vcmp.lt.s32.totalorder %v568, 2
      %vm589 = vcmp.lt.s32.totalorder %v568, 3
      %vm590 = vcmp.lt.s32.totalorder %v568, 4
      %v591 = vsel %vm587, %v571, %v574
      %v592 = vsel %vm590, %v580, 2102212464
      %v593 = vsel %vm589, %v577, %v592
      %v594 = vsel %vm588, %v591, %v593
      %v595 = vsel %vm587, %v574, %v577
      %v596 = vsel %vm590, %v583, 920167782
      %v597 = vsel %vm589, %v580, %v596
      %v598 = vsel %vm588, %v595, %v597
      %v599 = vsel %vm587, %v577, %v580
      %v600 = vsel %vm590, %v586, 1326507024
      %v601 = vsel %vm589, %v583, %v600
      %v602 = vsel %vm588, %v599, %v601
      %v603 = vshll.u32 %v563, 8
      %v604 = vand.u32 %v603, 65535
      %v605 = vshrl.u32 %v603, 16
      %v606 = vand.u32 %v602, 65535
      %v607 = vshrl.u32 %v602, 16
      %v608 = vmul.u32 %v604, %v606
      %v609 = vmul.u32 %v604, %v607
      %v610 = vmul.u32 %v605, %v606
      %v611 = vmul.u32 %v605, %v607
      %v612 = vshll.u32 %v609, 16
      %v613 = vshrl.u32 %v609, 16
      %v614 = vshll.u32 %v610, 16
      %v615 = vshrl.u32 %v610, 16
      %vm616 = vc.u32 %v608, %v612
      %v617 = vsel %vm616, 1, 0
      %v618 = vadd.s32 %v608, %v612
      %v619 = vadd.s32 %v611, %v617
      %vm620 = vc.u32 %v618, %v614
      %v621 = vsel %vm620, 1, 0
      %v622 = vadd.s32 %v618, %v614
      %v623 = vadd.s32 %v619, %v621
      %v624 = vadd.s32 %v623, %v613
      %v625 = vadd.s32 %v624, %v615
      %v626 = vand.u32 %v603, 65535
      %v627 = vshrl.u32 %v603, 16
      %v628 = vand.u32 %v598, 65535
      %v629 = vshrl.u32 %v598, 16
      %v630 = vmul.u32 %v626, %v628
      %v631 = vmul.u32 %v626, %v629
      %v632 = vmul.u32 %v627, %v628
      %v633 = vmul.u32 %v627, %v629
      %v634 = vshll.u32 %v631, 16
      %v635 = vshrl.u32 %v631, 16
      %v636 = vshll.u32 %v632, 16
      %v637 = vshrl.u32 %v632, 16
      %vm638 = vc.u32 %v630, %v634
      %v639 = vsel %vm638, 1, 0
      %v640 = vadd.s32 %v630, %v634
      %v641 = vadd.s32 %v633, %v639
      %vm642 = vc.u32 %v640, %v636
      %v643 = vsel %vm642, 1, 0
      %v644 = vadd.s32 %v640, %v636
      %v645 = vadd.s32 %v641, %v643
      %v646 = vadd.s32 %v645, %v635
      %v647 = vadd.s32 %v646, %v637
      %v648 = vmul.u32 %v603, %v594
      %v649 = vadd.s32 %v625, %v644
      %vm650 = vc.u32 %v625, %v644
      %v651 = vadd.s32 %v647, 1
      %v652 = vsel %vm650, %v651, %v647
      %v653 = vadd.s32 %v648, %v652
      %v654 = vadd.s32 %v653, 536870912
      %v655 = vshrl.u32 %v654, 30
      %v656 = vshll.u32 %v655, 30
      %v657 = vsub.s32 %v653, %v656
      %vm658 = vcmp.lt.s32.totalorder %v657, 0
      %v659 = vsub.s32 0, %v657
      %v660 = vsel %vm658, %v659, %v657
      %v661 = vclz %v660
      %v662 = vsub.s32 %v661, 2
      %vm663 = vcmp.gt.s32.totalorder 0, %v662
      %v664 = vsel %vm663, 0, %v662
      %v665 = vsub.s32 32, %v664
      %v666 = vshll.u32 %v657, %v664
      %v667 = vshrl.u32 %v649, %v665
      %v668 = vor.u32 %v666, %v667
      %v669 = vsub.s32 4294967266, %v664
      %v670 = vadd.s32 %v669, 127
      %v671 = vshll.u32 %v670, 23
      %v672 = vor.u32 4788187, %v671
      %v673 = vand.u32 2147483647, %v672
      %v675 = vcvt.s32.f32 %v668
      %v676 = vmul.f32 %v675, %v673
      %v677 = vxor.u32 %v676, 2147483648
      %v678 = vsel %vm557, %v677, %v676
      %v679 = vsub.s32 4, %v655
      %v680 = vsel %vm557, %v679, %v655
      %v681 = vsel %vm556, %v399, %v678
      %v682 = vsel %vm556, 0, %v680
      %v683 = vmul.f32 %v681, %v681
      %v684 = vmul.f32 %v683, -0.001358992
      %v685 = vadd.f32 %v684, 0.041655596
      %v686 = vmul.f32 %v683, %v685
      %v687 = vadd.f32 %v686, -0.4999988
      %v688 = vmul.f32 %v683, %v687
      %v689 = vadd.f32 1.0, %v688
      %v690 = vmul.f32 %v681, %v681
      %v691 = vmul.f32 %v690, -0.00019511016
      %v692 = vadd.f32 %v691, 0.008332121
      %v693 = vmul.f32 %v690, %v692
      %v694 = vadd.f32 %v693, -0.16666654
      %v695 = vmul.f32 %v690, %v694
      %v696 = vadd.f32 %v695, 1.0
      %v697 = vmul.f32 %v696, %v681
      %vm698 = vweird.f32 %v399
      %v699 = vadd.s32 %v682, 3
      %v700 = vand.u32 %v699, 3
      %vm701 = vcmp.lt.s32.totalorder %v700, 2
      %vm702 = vcmp.eq.s32.totalorder %v700, 0
      %v703 = vxor.u32 %v697, 2147483648
      %v704 = vsel %vm702, %v689, %v703
      %vm705 = vcmp.eq.s32.totalorder %v700, 2
      %v706 = vxor.u32 %v689, 2147483648
      %v707 = vsel %vm705, %v706, %v697
      %v708 = vsel %vm701, %v704, %v707
      %v709 = vsel %vm698, nan, %v708
      %710 = vst [vmem:[%s199] sm:$0xff] %v554
      %711 = vst [vmem:[%s199 + $0x8] sm:$0xff] %v709
      %s712 = smul.u32 2, %s15
      %p713 = scmp.lt.s32.totalorder %s712, 3
      %s714 = scalar_select %p713, %s712, 3
      %s715 = smul.addr %s714, 8
      %s716 = scalar_lea.vmem %s4, %s715
      // Predicated region
      $region37: #{random_or_learned_sinusoidal_pos_emb.1} parent=35 // pred_check
        %p717 = pneg %p122
      $region38: #{random_or_learned_sinusoidal_pos_emb.1} parent=35 // pred_check_branch
        %719 = sbr.rel (%p717) target = $region40
      $region39: #{random_or_learned_sinusoidal_pos_emb.1} parent=35 // pred_region
        %s720 = smul.u32 2, %s15
      $region40: #{random_or_learned_sinusoidal_pos_emb.1} parent=35 // pred_fallthru
        _
    $region36: #{random_or_learned_sinusoidal_pos_emb.1} parent=5 // pred_fallthru
      _
    %p721 = scmp.le.s32.totalorder 2, %s10
    // Predicated region
    $region41: #{random_or_learned_sinusoidal_pos_emb.1} parent=5 // pred_check
      %p722 = pneg %p721
    $region42: #{random_or_learned_sinusoidal_pos_emb.1} parent=5 // pred_check_branch
      %724 = sbr.rel (%p722) target = $region44
    $region43: #{random_or_learned_sinusoidal_pos_emb.1} parent=5 // pred_region
      %s725 = ssub.s32 %s10, 2
      // Predicated region
      $region45: #{random_or_learned_sinusoidal_pos_emb.1} parent=43 // pred_check
        %p726 = pneg %p128
      $region46: #{random_or_learned_sinusoidal_pos_emb.1} parent=43 // pred_check_branch
        %728 = sbr.rel (%p726) target = $region48
      $region47: #{random_or_learned_sinusoidal_pos_emb.1} parent=43 // pred_region
        %s729 = smul.u32 2, %s16
        %p730 = scmp.lt.s32.totalorder %s729, 3
        %s731 = scalar_select %p730, %s729, 3
        %s732 = smul.addr %s731, 8
        %s733 = scalar_lea.vmem %s4, %s732
      $region48: #{random_or_learned_sinusoidal_pos_emb.1} parent=43 // pred_fallthru
        _
    $region44: #{random_or_learned_sinusoidal_pos_emb.1} parent=5 // pred_fallthru
      _
  $region6: #{random_or_learned_sinusoidal_pos_emb.1} parent=0 // loop_footer
    %s14 = sadd.s32 1, %s10
  $region7: #{random_or_learned_sinusoidal_pos_emb.1} parent=0 // loop_footer_branch
    %9 = sbr.rel target = $region3
  $region8: #{random_or_learned_sinusoidal_pos_emb.1} parent=0 // loop_exit
    _

</llo_original>
